<compile_context>
chip_gen: v7x
topology: tpu7x:2x2x1
jax: 0.10.0
libtpu: 0.0.40
codegen_flags: <defaults>
</compile_context>

<pallas_src>
import jax
import jax.numpy as jnp
from jax.experimental import pallas as pl
from jax.experimental.pallas import tpu as pltpu

H = 1000        # hidden width of the PyTorch module
HP = 1024       # padded hidden width (multiple of 128 lanes / 256 MXU tile)
TK = 256        # fc2 reduction tile


def mlp_kernel(x_ref, w1_ref, b1_ref, w2_ref, b2_ref, w3_ref, b3_ref,
               o_ref, acc_ref):
    k = pl.program_id(0)

    @pl.when(k == 0)
    def _():
        acc_ref[...] = jnp.zeros_like(acc_ref)

    # fc1 slice for this K-tile: rank-1 outer product -> VPU broadcast multiply
    # (a K=1 matmul would waste an MXU push on a padded 128/256-wide K tile).
    h1_k = jnp.maximum(x_ref[...] * w1_ref[...] + b1_ref[...], 0.0)   # (N, TK) f32

    # fc2 partial product: bf16 operands on the MXU, f32 accumulation in VMEM.
    acc_ref[...] += jnp.dot(h1_k.astype(jnp.bfloat16), w2_ref[...],
                            preferred_element_type=jnp.float32)       # (N, HP)

    @pl.when(k == pl.num_programs(0) - 1)
    def _():
        h2 = jnp.maximum(acc_ref[...] + b2_ref[...], 0.0)             # (N, HP) f32
        # fc3: VPU multiply + XLU lane reduction instead of a 1-lane-wide matmul.
        out = jnp.sum(h2 * w3_ref[...], axis=-1, keepdims=True) + b3_ref[...]
        o_ref[...] = out                                              # (N, 1)


def prepare_params(params):
    """One-time weight prep: (in,out) layout, zero-pad H->HP, W2 in bf16."""
    w1 = jnp.zeros((1, HP), jnp.float32).at[:, :H].set(params["fc1_w"].T)
    b1 = jnp.zeros((1, HP), jnp.float32).at[:, :H].set(params["fc1_b"])
    w2 = (jnp.zeros((HP, HP), jnp.float32)
          .at[:H, :H].set(params["fc2_w"].T)
          .astype(jnp.bfloat16))
    b2 = jnp.zeros((1, HP), jnp.float32).at[:, :H].set(params["fc2_b"])
    # fc3 weight is (1, H) in PyTorch layout, which is already the row we need.
    w3 = jnp.zeros((1, HP), jnp.float32).at[:, :H].set(params["fc3_w"])
    b3 = params["fc3_b"].reshape(1, 1)
    return {"w1": w1, "b1": b1, "w2": w2, "b2": b2, "w3": w3, "b3": b3}


def net_forward(x, p):
    """x: (N, 1) f32. p: output of prepare_params()."""
    n = x.shape[0]
    nk = HP // TK
    return pl.pallas_call(
        mlp_kernel,
        out_shape=jax.ShapeDtypeStruct((n, 1), jnp.float32),
        grid_spec=pltpu.PrefetchScalarGridSpec(
            num_scalar_prefetch=0,
            grid=(nk,),
            in_specs=[
                pl.BlockSpec((n, 1), lambda k: (0, 0)),     # x
                pl.BlockSpec((1, TK), lambda k: (0, k)),    # w1 slice
                pl.BlockSpec((1, TK), lambda k: (0, k)),    # b1 slice
                pl.BlockSpec((TK, HP), lambda k: (k, 0)),   # w2 K-tile (bf16)
                pl.BlockSpec((1, HP), lambda k: (0, 0)),    # b2
                pl.BlockSpec((1, HP), lambda k: (0, 0)),    # w3 row
                pl.BlockSpec((1, 1), lambda k: (0, 0)),     # b3
            ],
            out_specs=pl.BlockSpec((n, 1), lambda k: (0, 0)),
            scratch_shapes=[pltpu.VMEM((n, HP), jnp.float32)],
        ),
        compiler_params=pltpu.CompilerParams(
            dimension_semantics=("arbitrary",),   # reduction axis
            vmem_limit_bytes=16 << 20,            # ample; safe on v7x's 64 MiB
        ),
    )(x, p["w1"], p["b1"], p["w2"], p["b2"], p["w3"], p["b3"])


def init_params(key):
    """PyTorch default nn.Linear init (uniform ±1/sqrt(fan_in)), (out,in) layout."""
    ks = jax.random.split(key, 6)

    def unif(k, shape, fan_in):
        bound = 1.0 / jnp.sqrt(float(fan_in))
        return jax.random.uniform(k, shape, jnp.float32, -bound, bound)

    return {
        "fc1_w": unif(ks[0], (H, 1), 1),
        "fc1_b": unif(ks[1], (H,), 1),
        "fc2_w": unif(ks[2], (H, H), H),
        "fc2_b": unif(ks[3], (H,), H),
        "fc3_w": unif(ks[4], (1, H), H),
        "fc3_b": unif(ks[5], (1,), H),
    }


def reference_forward(x, p):
    """Same math as the kernel (bf16-quantized W2 / bf16-rounded h1), f32 elsewhere."""
    h1 = jnp.maximum(x * p["w1"] + p["b1"], 0.0)
    h1 = h1.astype(jnp.bfloat16).astype(jnp.float32)
    h2 = jnp.maximum(h1 @ p["w2"].astype(jnp.float32) + p["b2"], 0.0)
    return jnp.sum(h2 * p["w3"], axis=-1, keepdims=True) + p["b3"]


if __name__ == "__main__":
    key = jax.random.PRNGKey(0)
    k_param, k_x = jax.random.split(key)
    params = prepare_params(init_params(k_param))

    batch = 8
    x = jax.random.uniform(k_x, (batch, 1), jnp.float32, -3.0, 3.0)

    out = net_forward(x, params)
    out = jax.block_until_ready(out)

    ref = reference_forward(x, params)
    assert out.shape == (batch, 1)
    assert jnp.allclose(out, ref, atol=2e-3, rtol=2e-3)

    print("KERNEL_OK")
</pallas_src>

<mosaic_0001>
module attributes {stable_mosaic.version = 11 : i64} {
  func.func @mlp_kernel(%arg0: i32, %arg1: memref<8x1xf32, #tpu.memory_space<vmem>>, %arg2: memref<1x256xf32, #tpu.memory_space<vmem>>, %arg3: memref<1x256xf32, #tpu.memory_space<vmem>>, %arg4: memref<256x1024xbf16, #tpu.memory_space<vmem>>, %arg5: memref<1x1024xf32, #tpu.memory_space<vmem>>, %arg6: memref<1x1024xf32, #tpu.memory_space<vmem>>, %arg7: memref<1x1xf32, #tpu.memory_space<vmem>>, %arg8: memref<8x1xf32, #tpu.memory_space<vmem>>, %arg9: memref<8x1024xf32, #tpu.memory_space<vmem>>) attributes {dimension_semantics = [#tpu.dimension_semantics<arbitrary>], iteration_bounds = array<i64: 4>, scalar_prefetch = 0 : i64, scratch_operands = 1 : i64, tpu.core_type = #tpu.core_type<tc>, window_params = [{pipeline_mode = #tpu.pipeline_mode<synchronous>, transform_indices = @transform_0, window_bounds = array<i64: 8, 1>}, {transform_indices = @transform_1, window_bounds = array<i64: 1, 256>}, {transform_indices = @transform_2, window_bounds = array<i64: 1, 256>}, {transform_indices = @transform_3, window_bounds = array<i64: 256, 1024>}, {pipeline_mode = #tpu.pipeline_mode<synchronous>, transform_indices = @transform_4, window_bounds = array<i64: 1, 1024>}, {pipeline_mode = #tpu.pipeline_mode<synchronous>, transform_indices = @transform_5, window_bounds = array<i64: 1, 1024>}, {pipeline_mode = #tpu.pipeline_mode<synchronous>, transform_indices = @transform_6, window_bounds = array<i64: 1, 1>}, {pipeline_mode = #tpu.pipeline_mode<synchronous>, transform_indices = @transform_7, window_bounds = array<i64: 8, 1>}]} {
    %c0_i32 = arith.constant 0 : i32
    %0 = arith.cmpi eq, %arg0, %c0_i32 : i32
    %1 = arith.extui %0 : i1 to i32
    %c0_i32_0 = arith.constant 0 : i32
    %2 = arith.cmpi ne, %1, %c0_i32_0 : i32
    scf.if %2 {
      %cst_14 = arith.constant 0.000000e+00 : f32
      %22 = vector.broadcast %cst_14 : f32 to vector<8x1024xf32>
      %c0_15 = arith.constant 0 : index
      %c0_16 = arith.constant 0 : index
      %23 = vector.load %arg9[%c0_15, %c0_16] : memref<8x1024xf32, #tpu.memory_space<vmem>>, vector<8x1024xf32>
      tpu.vector_store %arg9[%c0_15, %c0_16], %22 {strides = array<i32>} : memref<8x1024xf32, #tpu.memory_space<vmem>>, vector<8x1024xf32>,
    } else {
    }
    %c0 = arith.constant 0 : index
    %c0_1 = arith.constant 0 : index
    %3 = vector.load %arg1[%c0, %c0_1] : memref<8x1xf32, #tpu.memory_space<vmem>>, vector<8x1xf32>
    %c0_2 = arith.constant 0 : index
    %c0_3 = arith.constant 0 : index
    %4 = vector.load %arg2[%c0_2, %c0_3] : memref<1x256xf32, #tpu.memory_space<vmem>>, vector<1x256xf32>
    %5 = vector.broadcast %3 : vector<8x1xf32> to vector<8x256xf32>
    %6 = vector.broadcast %4 : vector<1x256xf32> to vector<8x256xf32>
    %7 = arith.mulf %5, %6 : vector<8x256xf32>
    %c0_4 = arith.constant 0 : index
    %c0_5 = arith.constant 0 : index
    %8 = vector.load %arg3[%c0_4, %c0_5] : memref<1x256xf32, #tpu.memory_space<vmem>>, vector<1x256xf32>
    %9 = vector.broadcast %8 : vector<1x256xf32> to vector<8x256xf32>
    %10 = arith.addf %7, %9 : vector<8x256xf32>
    %cst = arith.constant 0.000000e+00 : f32
    %11 = vector.broadcast %cst : f32 to vector<8x256xf32>
    %12 = arith.maximumf %10, %11 : vector<8x256xf32>
    %c0_6 = arith.constant 0 : index
    %c0_7 = arith.constant 0 : index
    %13 = vector.load %arg9[%c0_6, %c0_7] : memref<8x1024xf32, #tpu.memory_space<vmem>>, vector<8x1024xf32>
    %14 = arith.truncf %12 : vector<8x256xf32> to vector<8x256xbf16>
    %c0_8 = arith.constant 0 : index
    %c0_9 = arith.constant 0 : index
    %15 = vector.load %arg4[%c0_8, %c0_9] : memref<256x1024xbf16, #tpu.memory_space<vmem>>, vector<256x1024xbf16>
    %cst_10 = arith.constant dense<0.000000e+00> : vector<8x1024xf32>
    %16 = tpu.matmul %14, %15, %cst_10 {dimension_numbers = #tpu.dot_dimension_numbers<[1], [0], [0], [1], [0, 0, 1, 1], [], []>} : vector<8x256xbf16>, vector<256x1024xbf16>, vector<8x1024xf32> -> vector<8x1024xf32>
    %17 = arith.addf %13, %16 : vector<8x1024xf32>
    %c0_11 = arith.constant 0 : index
    %c0_12 = arith.constant 0 : index
    %18 = vector.load %arg9[%c0_11, %c0_12] : memref<8x1024xf32, #tpu.memory_space<vmem>>, vector<8x1024xf32>
    tpu.vector_store %arg9[%c0_11, %c0_12], %17 {strides = array<i32>} : memref<8x1024xf32, #tpu.memory_space<vmem>>, vector<8x1024xf32>,
    %c3_i32 = arith.constant 3 : i32
    %19 = arith.cmpi eq, %arg0, %c3_i32 : i32
    %20 = arith.extui %19 : i1 to i32
    %c0_i32_13 = arith.constant 0 : i32
    %21 = arith.cmpi ne, %20, %c0_i32_13 : i32
    scf.if %21 {
      %c0_14 = arith.constant 0 : index
      %c0_15 = arith.constant 0 : index
      %22 = vector.load %arg9[%c0_14, %c0_15] : memref<8x1024xf32, #tpu.memory_space<vmem>>, vector<8x1024xf32>
      %c0_16 = arith.constant 0 : index
      %c0_17 = arith.constant 0 : index
      %23 = vector.load %arg5[%c0_16, %c0_17] : memref<1x1024xf32, #tpu.memory_space<vmem>>, vector<1x1024xf32>
      %24 = vector.broadcast %23 : vector<1x1024xf32> to vector<8x1024xf32>
      %25 = arith.addf %22, %24 : vector<8x1024xf32>
      %cst_18 = arith.constant 0.000000e+00 : f32
      %26 = vector.broadcast %cst_18 : f32 to vector<8x1024xf32>
      %27 = arith.maximumf %25, %26 : vector<8x1024xf32>
      %c0_19 = arith.constant 0 : index
      %c0_20 = arith.constant 0 : index
      %28 = vector.load %arg6[%c0_19, %c0_20] : memref<1x1024xf32, #tpu.memory_space<vmem>>, vector<1x1024xf32>
      %29 = vector.broadcast %28 : vector<1x1024xf32> to vector<8x1024xf32>
      %30 = arith.mulf %27, %29 : vector<8x1024xf32>
      %cst_21 = arith.constant dense<0.000000e+00> : vector<8xf32>
      %31 = vector.multi_reduction <add>, %30, %cst_21 [1] : vector<8x1024xf32> to vector<8xf32>
      %32 = vector.shape_cast %31 : vector<8xf32> to vector<8x1xf32>
      %c0_22 = arith.constant 0 : index
      %c0_23 = arith.constant 0 : index
      %33 = vector.load %arg7[%c0_22, %c0_23] : memref<1x1xf32, #tpu.memory_space<vmem>>, vector<1x1xf32>
      %34 = vector.broadcast %33 : vector<1x1xf32> to vector<8x1xf32>
      %35 = arith.addf %32, %34 : vector<8x1xf32>
      %c0_24 = arith.constant 0 : index
      %c0_25 = arith.constant 0 : index
      %36 = vector.load %arg8[%c0_24, %c0_25] : memref<8x1xf32, #tpu.memory_space<vmem>>, vector<8x1xf32>
      tpu.vector_store %arg8[%c0_24, %c0_25], %35 {strides = array<i32>} : memref<8x1xf32, #tpu.memory_space<vmem>>, vector<8x1xf32>,
    } else {
    }
    return
  }
  func.func @transform_0(%arg0: i32) -> (i32, i32) {
    %c0_i32 = arith.constant 0 : i32
    %c0_i32_0 = arith.constant 0 : i32
    %c0_i32_1 = arith.constant 0 : i32
    return %c0_i32, %c0_i32_0 : i32, i32
  }
  func.func @transform_1(%arg0: i32) -> (i32, i32) {
    %c0_i32 = arith.constant 0 : i32
    %c0_i32_0 = arith.constant 0 : i32
    return %c0_i32, %arg0 : i32, i32
  }
  func.func @transform_2(%arg0: i32) -> (i32, i32) {
    %c0_i32 = arith.constant 0 : i32
    %c0_i32_0 = arith.constant 0 : i32
    return %c0_i32, %arg0 : i32, i32
  }
  func.func @transform_3(%arg0: i32) -> (i32, i32) {
    %c0_i32 = arith.constant 0 : i32
    %c0_i32_0 = arith.constant 0 : i32
    return %arg0, %c0_i32 : i32, i32
  }
  func.func @transform_4(%arg0: i32) -> (i32, i32) {
    %c0_i32 = arith.constant 0 : i32
    %c0_i32_0 = arith.constant 0 : i32
    %c0_i32_1 = arith.constant 0 : i32
    return %c0_i32, %c0_i32_0 : i32, i32
  }
  func.func @transform_5(%arg0: i32) -> (i32, i32) {
    %c0_i32 = arith.constant 0 : i32
    %c0_i32_0 = arith.constant 0 : i32
    %c0_i32_1 = arith.constant 0 : i32
    return %c0_i32, %c0_i32_0 : i32, i32
  }
  func.func @transform_6(%arg0: i32) -> (i32, i32) {
    %c0_i32 = arith.constant 0 : i32
    %c0_i32_0 = arith.constant 0 : i32
    %c0_i32_1 = arith.constant 0 : i32
    return %c0_i32, %c0_i32_0 : i32, i32
  }
  func.func @transform_7(%arg0: i32) -> (i32, i32) {
    %c0_i32 = arith.constant 0 : i32
    %c0_i32_0 = arith.constant 0 : i32
    %c0_i32_1 = arith.constant 0 : i32
    return %c0_i32, %c0_i32_0 : i32, i32
  }
}

</mosaic_0001>

<llo_original>
// kernel: tpu_custom_call.1
$region0: #{tpu_custom_call.1}
  #allocation0 [shape = 'u32[]', space=smem, size = 0x4, offset = 0x4, fixed_abs, tag = 'smem constant byte address 0x4 - core index']
  #allocation1 [shape = 'u32[144,128]{1,0:T(1,128)}', space=vmem, size = 0x12000, scoped, tag = 'internal scratch']
  #allocation2 [shape = 'f32[8,1024]{1,0:T(8,128)}', space=vmem, size = 0x8000, scoped, tag = 'scratch operand']
  #allocation3 [shape = 'f32[1,1]{1,0:T(1,128)S(1)}', space=vmem, size = 0x200, scoped, tag = 'scoped memory for tpu_custom_call.1']
  %s0 = inlined_call_operand.vmem [shape: f32[8,1], index: 0, kind: input, shape index: {}]
  %s1 = inlined_call_operand.hbm [shape: f32[1,1024], index: 1, kind: input, shape index: {}]
  %s2 = inlined_call_operand.hbm [shape: f32[1,1024], index: 2, kind: input, shape index: {}]
  %s3 = inlined_call_operand.hbm [shape: bf16[1024,1024], index: 3, kind: input, shape index: {}]
  %s4 = inlined_call_operand.hbm [shape: f32[1,1024], index: 4, kind: input, shape index: {}]
  %s5 = inlined_call_operand.hbm [shape: f32[1,1024], index: 5, kind: input, shape index: {}]
  %s6 = inlined_call_operand.<no memory space> [shape: f32[1,1], index: 6, kind: input, shape index: {}]
  %s7 = inlined_call_operand.vmem [shape: f32[8,1], index: 7, kind: output, shape index: {}]
  %s8 = sld [smem:[#allocation0]]
  $region89: #{tpu_custom_call.1} parent=0
    _
  %s10 = ssub.s32 1, %s8
  %s11 = scalar_select 0, %s10, %s8
  %v12 = vstv %s6
  %13 = vst [vmem:[#allocation3] sm:$0x1] %v12
  $region1: #{tpu_custom_call.1} parent=0
    #allocation4 [shape = 'u8[2048]{0}', space=vmem, size = 0x800, scoped, tag = 'input window, operand 1']
    #allocation5 [shape = 's32[2]{0}', space=sflag, size = 0x8, scoped, tag = 'scoped memory for tpu_custom_call.1']
    #allocation6 [shape = 'u8[2048]{0}', space=vmem, size = 0x800, scoped, tag = 'input window, operand 2']
    #allocation7 [shape = 's32[2]{0}', space=sflag, size = 0x8, scoped, tag = 'scoped memory for tpu_custom_call.1']
    #allocation8 [shape = 'u8[1048576]{0}', space=vmem, size = 0x100000, scoped, tag = 'input window, operand 3']
    #allocation9 [shape = 'u8[4096]{0}', space=vmem, size = 0x1000, scoped, tag = 'input window, operand 4, single buffered']
    #allocation10 [shape = 's32[1]{0}', space=sflag, size = 0x4, scoped, tag = 'scoped memory for tpu_custom_call.1']
    #allocation11 [shape = 'u8[4096]{0}', space=vmem, size = 0x1000, scoped, tag = 'input window, operand 5, single buffered']
    %14 = vsyncpa [#allocation5], 0
    %s15 = scalar_lea.sflag [#allocation5], 1
    %16 = vsyncpa %s15, 0
    %17 = vsyncpa [#allocation7], 0
    %s18 = scalar_lea.sflag [#allocation7], 1
    %19 = vsyncpa %s18, 0
    %20 = vsyncpa [#allocation10], 0
    loop: start=0, step=1, limit=6
    $region2: #{tpu_custom_call.1} parent=1 // loop_pre_header
      _
    $region3: #{tpu_custom_call.1} parent=1 // loop_header
      %s22 = sphi 0, %s26
      %p23 = scmp.ge.s32.totalorder %s22, 6
      %s30 = sphi 0, %s30
      %s32 = sphi 0, %s30
      %s33 = sphi 0, %s32
      %s47 = sphi 0, %s33
      %s53 = sphi 0, %s55
      %s56 = sphi 0, %s53
      %s57 = sphi 0, %s56
      %s73 = sphi 0, %s57
      %s79 = sphi 0, %s81
      %s82 = sphi 0, %s79
      %s83 = sphi 0, %s82
      %s99 = sphi 0, %s83
      %s105 = sphi 0, %s107
      %s108 = sphi 0, %s105
      %s109 = sphi 0, %s108
      %s125 = sphi 0, %s109
      %s129 = sphi 0, %s129
      %s131 = sphi 0, %s129
      %s132 = sphi 0, %s131
      %s146 = sphi 0, %s132
      %s150 = sphi 0, %s150
      %s152 = sphi 0, %s150
      %s153 = sphi 0, %s152
      %s167 = sphi 0, %s153
      %s171 = sphi 0, %s171
      %s173 = sphi 0, %s171
      %s174 = sphi 0, %s173
      %s188 = sphi 0, %s174
      %s192 = sphi 0, %s192
      %s194 = sphi 0, %s192
      %s195 = sphi 0, %s194
      %s209 = sphi 0, %s195
    $region4: #{tpu_custom_call.1} parent=1 // loop_header_branch
      %25 = sbr.rel (%p23) target = $region8
    $region5: #{tpu_custom_call.1} parent=1 // loop_body
      %s27 = ssub.s32 %s22, 1
      %s28 = ssub.s32 %s22, 2
      %s29 = sadd.s32 %s22, 1
      %s31 = sadd.s32 %s30, 1
      %p34 = scmp.eq.s32.totalorder %s22, 3
      %p35 = scmp.ne.s32.totalorder %s30, %s32
      %p36 = scmp.eq.s32.totalorder %s22, 0
      %p37 = por %p35, %p36
      %p38 = scmp.ne.s32.totalorder %s30, %s32
      %p39 = scmp.eq.s32.totalorder %s27, 3
      %p40 = por %p38, %p39
      %p41 = scmp.ne.s32.totalorder %s32, %s33
      %p42 = scmp.eq.s32.totalorder %s27, 0
      %p43 = por %p41, %p42
      %p44 = scmp.ne.s32.totalorder %s32, %s33
      %p45 = scmp.eq.s32.totalorder %s28, 3
      %p46 = por %p44, %p45
      %p48 = scmp.ne.s32.totalorder %s33, %s47
      %p49 = scmp.eq.s32.totalorder %s28, 0
      %p50 = por %p48, %p49
      %s51 = ssub.s32 %s22, %s29
      %p52 = scmp.eq.s32.totalorder %s51, 0
      %s54 = sadd.s32 %s53, 1
      %s55 = scalar_select %p52, %s53, %s54
      %p58 = pneg %p52
      %p59 = scmp.eq.s32.totalorder %s22, 3
      %p60 = por %p58, %p59
      %p61 = scmp.ne.s32.totalorder %s53, %s56
      %p62 = scmp.eq.s32.totalorder %s22, 0
      %p63 = por %p61, %p62
      %p64 = scmp.ne.s32.totalorder %s53, %s56
      %p65 = scmp.eq.s32.totalorder %s27, 3
      %p66 = por %p64, %p65
      %p67 = scmp.ne.s32.totalorder %s56, %s57
      %p68 = scmp.eq.s32.totalorder %s27, 0
      %p69 = por %p67, %p68
      %p70 = scmp.ne.s32.totalorder %s56, %s57
      %p71 = scmp.eq.s32.totalorder %s28, 3
      %p72 = por %p70, %p71
      %p74 = scmp.ne.s32.totalorder %s57, %s73
      %p75 = scmp.eq.s32.totalorder %s28, 0
      %p76 = por %p74, %p75
      %s77 = ssub.s32 %s22, %s29
      %p78 = scmp.eq.s32.totalorder %s77, 0
      %s80 = sadd.s32 %s79, 1
      %s81 = scalar_select %p78, %s79, %s80
      %p84 = pneg %p78
      %p85 = scmp.eq.s32.totalorder %s22, 3
      %p86 = por %p84, %p85
      %p87 = scmp.ne.s32.totalorder %s79, %s82
      %p88 = scmp.eq.s32.totalorder %s22, 0
      %p89 = por %p87, %p88
      %p90 = scmp.ne.s32.totalorder %s79, %s82
      %p91 = scmp.eq.s32.totalorder %s27, 3
      %p92 = por %p90, %p91
      %p93 = scmp.ne.s32.totalorder %s82, %s83
      %p94 = scmp.eq.s32.totalorder %s27, 0
      %p95 = por %p93, %p94
      %p96 = scmp.ne.s32.totalorder %s82, %s83
      %p97 = scmp.eq.s32.totalorder %s28, 3
      %p98 = por %p96, %p97
      %p100 = scmp.ne.s32.totalorder %s83, %s99
      %p101 = scmp.eq.s32.totalorder %s28, 0
      %p102 = por %p100, %p101
      %s103 = ssub.s32 %s22, %s29
      %p104 = scmp.eq.s32.totalorder %s103, 0
      %s106 = sadd.s32 %s105, 1
      %s107 = scalar_select %p104, %s105, %s106
      %p110 = pneg %p104
      %p111 = scmp.eq.s32.totalorder %s22, 3
      %p112 = por %p110, %p111
      %p113 = scmp.ne.s32.totalorder %s105, %s108
      %p114 = scmp.eq.s32.totalorder %s22, 0
      %p115 = por %p113, %p114
      %p116 = scmp.ne.s32.totalorder %s105, %s108
      %p117 = scmp.eq.s32.totalorder %s27, 3
      %p118 = por %p116, %p117
      %p119 = scmp.ne.s32.totalorder %s108, %s109
      %p120 = scmp.eq.s32.totalorder %s27, 0
      %p121 = por %p119, %p120
      %p122 = scmp.ne.s32.totalorder %s108, %s109
      %p123 = scmp.eq.s32.totalorder %s28, 3
      %p124 = por %p122, %p123
      %p126 = scmp.ne.s32.totalorder %s109, %s125
      %p127 = scmp.eq.s32.totalorder %s28, 0
      %p128 = por %p126, %p127
      %s130 = sadd.s32 %s129, 1
      %p133 = scmp.eq.s32.totalorder %s22, 3
      %p134 = scmp.ne.s32.totalorder %s129, %s131
      %p135 = scmp.eq.s32.totalorder %s22, 0
      %p136 = por %p134, %p135
      %p137 = scmp.ne.s32.totalorder %s129, %s131
      %p138 = scmp.eq.s32.totalorder %s27, 3
      %p139 = por %p137, %p138
      %p140 = scmp.ne.s32.totalorder %s131, %s132
      %p141 = scmp.eq.s32.totalorder %s27, 0
      %p142 = por %p140, %p141
      %p143 = scmp.ne.s32.totalorder %s131, %s132
      %p144 = scmp.eq.s32.totalorder %s28, 3
      %p145 = por %p143, %p144
      %p147 = scmp.ne.s32.totalorder %s132, %s146
      %p148 = scmp.eq.s32.totalorder %s28, 0
      %p149 = por %p147, %p148
      %s151 = sadd.s32 %s150, 1
      %p154 = scmp.eq.s32.totalorder %s22, 3
      %p155 = scmp.ne.s32.totalorder %s150, %s152
      %p156 = scmp.eq.s32.totalorder %s22, 0
      %p157 = por %p155, %p156
      %p158 = scmp.ne.s32.totalorder %s150, %s152
      %p159 = scmp.eq.s32.totalorder %s27, 3
      %p160 = por %p158, %p159
      %p161 = scmp.ne.s32.totalorder %s152, %s153
      %p162 = scmp.eq.s32.totalorder %s27, 0
      %p163 = por %p161, %p162
      %p164 = scmp.ne.s32.totalorder %s152, %s153
      %p165 = scmp.eq.s32.totalorder %s28, 3
      %p166 = por %p164, %p165
      %p168 = scmp.ne.s32.totalorder %s153, %s167
      %p169 = scmp.eq.s32.totalorder %s28, 0
      %p170 = por %p168, %p169
      %s172 = sadd.s32 %s171, 1
      %p175 = scmp.eq.s32.totalorder %s22, 3
      %p176 = scmp.ne.s32.totalorder %s171, %s173
      %p177 = scmp.eq.s32.totalorder %s22, 0
      %p178 = por %p176, %p177
      %p179 = scmp.ne.s32.totalorder %s171, %s173
      %p180 = scmp.eq.s32.totalorder %s27, 3
      %p181 = por %p179, %p180
      %p182 = scmp.ne.s32.totalorder %s173, %s174
      %p183 = scmp.eq.s32.totalorder %s27, 0
      %p184 = por %p182, %p183
      %p185 = scmp.ne.s32.totalorder %s173, %s174
      %p186 = scmp.eq.s32.totalorder %s28, 3
      %p187 = por %p185, %p186
      %p189 = scmp.ne.s32.totalorder %s174, %s188
      %p190 = scmp.eq.s32.totalorder %s28, 0
      %p191 = por %p189, %p190
      %s193 = sadd.s32 %s192, 1
      %p196 = scmp.eq.s32.totalorder %s22, 3
      %p197 = scmp.ne.s32.totalorder %s192, %s194
      %p198 = scmp.eq.s32.totalorder %s22, 0
      %p199 = por %p197, %p198
      %p200 = scmp.ne.s32.totalorder %s192, %s194
      %p201 = scmp.eq.s32.totalorder %s27, 3
      %p202 = por %p200, %p201
      %p203 = scmp.ne.s32.totalorder %s194, %s195
      %p204 = scmp.eq.s32.totalorder %s27, 0
      %p205 = por %p203, %p204
      %p206 = scmp.ne.s32.totalorder %s194, %s195
      %p207 = scmp.eq.s32.totalorder %s28, 3
      %p208 = por %p206, %p207
      %p210 = scmp.ne.s32.totalorder %s195, %s209
      %p211 = scmp.eq.s32.totalorder %s28, 0
      %p212 = por %p210, %p211
      %p213 = scmp.le.s32.totalorder 1, %s22
      %p214 = scmp.lt.s32.totalorder %s22, 5
      %p215 = pnand %p213, %p214
      %p216 = pneg %p215
      // Predicated region
      $region9: #{tpu_custom_call.1} parent=5 // pred_check
        _
      $region10: #{tpu_custom_call.1} parent=5 // pred_check_branch
        %218 = sbr.rel (%p215) target = $region12
      $region11: #{tpu_custom_call.1} parent=5 // pred_region
        %s219 = ssub.s32 %s22, 1
        // Predicated region
        $region13: #{tpu_custom_call.1} parent=11 // pred_check
          %p220 = pneg %p43
        $region14: #{tpu_custom_call.1} parent=11 // pred_check_branch
          %222 = sbr.rel (%p220) target = $region16
        $region15: #{tpu_custom_call.1} parent=11 // pred_region
          _
        $region16: #{tpu_custom_call.1} parent=11 // pred_fallthru
          _
        // Predicated region
        $region17: #{tpu_custom_call.1} parent=11 // pred_check
          %p223 = pneg %p142
        $region18: #{tpu_custom_call.1} parent=11 // pred_check_branch
          %225 = sbr.rel (%p223) target = $region20
        $region19: #{tpu_custom_call.1} parent=11 // pred_region
          %s227 = ssub.s32 128, 128
          %228 = vsyncadd [#allocation10], %s227
          %s230 = sshll.u32 [#allocation9], 4
          %s231 = int_to_ptr.vmem [resolvable:$true] %s230
          %233 = dma.hbm_to_vmem [thread:$0]  %s4, 128, %s231, [#allocation10]
        $region20: #{tpu_custom_call.1} parent=11 // pred_fallthru
          _
        // Predicated region
        $region21: #{tpu_custom_call.1} parent=11 // pred_check
          %p234 = pneg %p163
        $region22: #{tpu_custom_call.1} parent=11 // pred_check_branch
          %236 = sbr.rel (%p234) target = $region24
        $region23: #{tpu_custom_call.1} parent=11 // pred_region
          %s238 = ssub.s32 128, 128
          %239 = vsyncadd [#allocation10], %s238
          %s241 = sshll.u32 [#allocation11], 4
          %s242 = int_to_ptr.vmem [resolvable:$true] %s241
          %244 = dma.hbm_to_vmem [thread:$0]  %s5, 128, %s242, [#allocation10]
        $region24: #{tpu_custom_call.1} parent=11 // pred_fallthru
          _
        // Predicated region
        $region25: #{tpu_custom_call.1} parent=11 // pred_check
          %p245 = pneg %p184
        $region26: #{tpu_custom_call.1} parent=11 // pred_check_branch
          %247 = sbr.rel (%p245) target = $region28
        $region27: #{tpu_custom_call.1} parent=11 // pred_region
          _
        $region28: #{tpu_custom_call.1} parent=11 // pred_fallthru
          _
      $region12: #{tpu_custom_call.1} parent=5 // pred_fallthru
        _
      %p248 = scmp.lt.s32.totalorder %s22, 4
      // Predicated region
      $region29: #{tpu_custom_call.1} parent=5 // pred_check
        %p249 = pneg %p248
      $region30: #{tpu_custom_call.1} parent=5 // pred_check_branch
        %251 = sbr.rel (%p249) target = $region32
      $region31: #{tpu_custom_call.1} parent=5 // pred_region
        // Predicated region
        $region33: #{tpu_custom_call.1} parent=31 // pred_check
          %p252 = pneg %p63
        $region34: #{tpu_custom_call.1} parent=31 // pred_check_branch
          %254 = sbr.rel (%p252) target = $region36
        $region35: #{tpu_custom_call.1} parent=31 // pred_region
          %s255 = sand.u32 %s53, 1
          %s256 = scalar_lea.sflag [#allocation5], %s255
          %s257 = sand.u32 %s53, 1
          %s258 = smul.addr %s257, 2
          %s259 = scalar_lea.vmem [#allocation4], %s258
          %s260 = smul.u32 2, %s22
          %s262 = ssub.s32 32, 32
          %263 = vsyncadd %s256, %s262
          %s264 = smul.addr %s260, 16
          %s265 = scalar_lea.hbm %s1, %s264
          %s267 = sshll.u32 %s259, 4
          %s268 = int_to_ptr.vmem [resolvable:$true] %s267
          %270 = dma.hbm_to_vmem [thread:$0]  %s265, 32, %s268, %s256
        $region36: #{tpu_custom_call.1} parent=31 // pred_fallthru
          _
        // Predicated region
        $region37: #{tpu_custom_call.1} parent=31 // pred_check
          %p271 = pneg %p89
        $region38: #{tpu_custom_call.1} parent=31 // pred_check_branch
          %273 = sbr.rel (%p271) target = $region40
        $region39: #{tpu_custom_call.1} parent=31 // pred_region
          %s274 = sand.u32 %s22, 1
          %s275 = scalar_lea.sflag [#allocation7], %s274
          %s276 = sand.u32 %s79, 1
          %s277 = smul.addr %s276, 2
          %s278 = scalar_lea.vmem [#allocation6], %s277
          %s279 = smul.u32 2, %s22
          %s281 = ssub.s32 32, 32
          %282 = vsyncadd %s275, %s281
          %s283 = smul.addr %s279, 16
          %s284 = scalar_lea.hbm %s2, %s283
          %s286 = sshll.u32 %s278, 4
          %s287 = int_to_ptr.vmem [resolvable:$true] %s286
          %289 = dma.hbm_to_vmem [thread:$0]  %s284, 32, %s287, %s275
        $region40: #{tpu_custom_call.1} parent=31 // pred_fallthru
          _
        // Predicated region
        $region41: #{tpu_custom_call.1} parent=31 // pred_check
          %p290 = pneg %p115
        $region42: #{tpu_custom_call.1} parent=31 // pred_check_branch
          %292 = sbr.rel (%p290) target = $region44
        $region43: #{tpu_custom_call.1} parent=31 // pred_region
          %s293 = sand.u32 %s22, 1
          %s294 = scalar_lea.sflag [#allocation7], %s293
          %s295 = sand.u32 %s105, 1
          %s296 = smul.addr %s295, 1024
          %s297 = scalar_lea.vmem [#allocation8], %s296
          %s298 = smul.u32 32, %s22
          %s300 = ssub.s32 16384, 16384
          %301 = vsyncadd %s294, %s300
          %s302 = smul.addr %s298, 8
          %s303 = smul.addr %s302, 64
          %s304 = scalar_lea.hbm %s3, %s303
          %s305 = sshll.u32 %s297, 4
          %s306 = int_to_ptr.vmem [resolvable:$true] %s305
          %311 = dma.hbm_to_vmem [thread:$0]  %s304, 16384, %s306, %s294, 512, 512, 32
        $region44: #{tpu_custom_call.1} parent=31 // pred_fallthru
          _
      $region32: #{tpu_custom_call.1} parent=5 // pred_fallthru
        _
      %p312 = scmp.le.s32.totalorder 1, %s22
      %p313 = scmp.lt.s32.totalorder %s22, 5
      %p314 = pnand %p312, %p313
      %p315 = pneg %p314
      // Predicated region
      $region45: #{tpu_custom_call.1} parent=5 // pred_check
        _
      $region46: #{tpu_custom_call.1} parent=5 // pred_check_branch
        %317 = sbr.rel (%p314) target = $region48
      $region47: #{tpu_custom_call.1} parent=5 // pred_region
        %s318 = ssub.s32 %s22, 1
        %s319 = sand.u32 %s56, 1
        %s320 = scalar_lea.sflag [#allocation5], %s319
        %s321 = sand.u32 %s56, 1
        %s322 = smul.addr %s321, 2
        %s323 = scalar_lea.vmem [#allocation4], %s322
        // Predicated region
        $region49: #{tpu_custom_call.1} parent=47 // pred_check
          %p324 = pneg %p69
        $region50: #{tpu_custom_call.1} parent=47 // pred_check_branch
          %326 = sbr.rel (%p324) target = $region52
        $region51: #{tpu_custom_call.1} parent=47 // pred_region
          %327 = dma.done %s320, 32
        $region52: #{tpu_custom_call.1} parent=47 // pred_fallthru
          _
        %s328 = sand.u32 %s27, 1
        %s329 = scalar_lea.sflag [#allocation7], %s328
        %s330 = sand.u32 %s82, 1
        %s331 = smul.addr %s330, 2
        %s332 = scalar_lea.vmem [#allocation6], %s331
        // Predicated region
        $region53: #{tpu_custom_call.1} parent=47 // pred_check
          %p333 = pneg %p95
        $region54: #{tpu_custom_call.1} parent=47 // pred_check_branch
          %335 = sbr.rel (%p333) target = $region56
        $region55: #{tpu_custom_call.1} parent=47 // pred_region
          %336 = dma.done %s329, 32
        $region56: #{tpu_custom_call.1} parent=47 // pred_fallthru
          _
        %s337 = sand.u32 %s27, 1
        %s338 = scalar_lea.sflag [#allocation7], %s337
        %s339 = sand.u32 %s108, 1
        %s340 = smul.addr %s339, 1024
        %s341 = scalar_lea.vmem [#allocation8], %s340
        // Predicated region
        $region57: #{tpu_custom_call.1} parent=47 // pred_check
          %p342 = pneg %p121
        $region58: #{tpu_custom_call.1} parent=47 // pred_check_branch
          %344 = sbr.rel (%p342) target = $region60
        $region59: #{tpu_custom_call.1} parent=47 // pred_region
          %345 = dma.done %s338, 16384
        $region60: #{tpu_custom_call.1} parent=47 // pred_fallthru
          _
        // Predicated region
        $region61: #{tpu_custom_call.1} parent=47 // pred_check
          %p346 = pneg %p142
        $region62: #{tpu_custom_call.1} parent=47 // pred_check_branch
          %348 = sbr.rel (%p346) target = $region64
        $region63: #{tpu_custom_call.1} parent=47 // pred_region
          %349 = dma.done [#allocation10], 128
        $region64: #{tpu_custom_call.1} parent=47 // pred_fallthru
          _
        // Predicated region
        $region65: #{tpu_custom_call.1} parent=47 // pred_check
          %p350 = pneg %p163
        $region66: #{tpu_custom_call.1} parent=47 // pred_check_branch
          %352 = sbr.rel (%p350) target = $region68
        $region67: #{tpu_custom_call.1} parent=47 // pred_region
          %353 = dma.done [#allocation10], 128
        $region68: #{tpu_custom_call.1} parent=47 // pred_fallthru
          _
        %p354 = pneg %p43
        %p355 = pneg %p40
        %s356 = sand.u32 %s56, 1
        %s357 = scalar_lea.sflag [#allocation5], %s356
        %s358 = sand.u32 %s56, 1
        %s359 = smul.addr %s358, 2
        %s360 = scalar_lea.vmem [#allocation4], %s359
        %p361 = pneg %p69
        %p362 = pneg %p66
        %s363 = sand.u32 %s27, 1
        %s364 = scalar_lea.sflag [#allocation7], %s363
        %s365 = sand.u32 %s82, 1
        %s366 = smul.addr %s365, 2
        %s367 = scalar_lea.vmem [#allocation6], %s366
        %p368 = pneg %p95
        %p369 = pneg %p92
        %s370 = sand.u32 %s27, 1
        %s371 = scalar_lea.sflag [#allocation7], %s370
        %s372 = sand.u32 %s108, 1
        %s373 = smul.addr %s372, 1024
        %s374 = scalar_lea.vmem [#allocation8], %s373
        %p375 = pneg %p121
        %p376 = pneg %p118
        %p377 = pneg %p142
        %p378 = pneg %p139
        %p379 = pneg %p163
        %p380 = pneg %p160
        %p381 = pneg %p184
        %p382 = pneg %p181
        %p383 = pneg %p205
        %p384 = pneg %p202
        %s385 = smul.u32 2, %s27
        %s386 = smul.u32 2, %s27
        %s387 = smul.u32 32, %s27
        %p388 = scmp.eq.s32.totalorder %s27, 0
        // Predicated region
        $region69: #{tpu_custom_call.1} parent=47 // pred_check
          %p389 = pneg %p388
        $region70: #{tpu_custom_call.1} parent=47 // pred_check_branch
          %391 = sbr.rel (%p389) target = $region72
        $region71: #{tpu_custom_call.1} parent=47 // pred_region
          %392 = vst [vmem:[#allocation2] sm:$0xff] 0.0
          %393 = vst [vmem:[#allocation2 + $0x8] sm:$0xff] 0.0
          %394 = vst [vmem:[#allocation2 + $0x10] sm:$0xff] 0.0
          %395 = vst [vmem:[#allocation2 + $0x18] sm:$0xff] 0.0
          %396 = vst [vmem:[#allocation2 + $0x20] sm:$0xff] 0.0
          %397 = vst [vmem:[#allocation2 + $0x28] sm:$0xff] 0.0
          %398 = vst [vmem:[#allocation2 + $0x30] sm:$0xff] 0.0
          %399 = vst [vmem:[#allocation2 + $0x38] sm:$0xff] 0.0
        $region72: #{tpu_custom_call.1} parent=47 // pred_fallthru
          _
        %v400 = vld [vmem:[%s0] sm:$0xff]
        %v401 = vld [vmem:[%s323] sm:$0x3]
        %403 = vset.pattern.permute.xlu0 0
        %404 = vperm.xlu0 %403, %v400
        %v405 = vpop.permute.xlu0 %404
        %v408 = vlaneseq
        %v409 = vshrl.u32 %v408, 7
        %v410 = vsub.s32 0, %v409
        %v411 = vrot.slane %v401, %v410
        %v412 = vlaneseq
        %v413 = vshrl.u32 %v412, 7
        %v414 = vsub.s32 1, %v413
        %v415 = vrot.slane %v401, %v414
        %v418 = vmul.f32 %v405, %v411
        %v419 = vmul.f32 %v405, %v415
        %v420 = vld [vmem:[%s332] sm:$0x3]
        %v422 = vlaneseq
        %v423 = vshrl.u32 %v422, 7
        %v424 = vsub.s32 0, %v423
        %v425 = vrot.slane %v420, %v424
        %v426 = vlaneseq
        %v427 = vshrl.u32 %v426, 7
        %v428 = vsub.s32 1, %v427
        %v429 = vrot.slane %v420, %v428
        %v432 = vadd.f32 %v418, %v425
        %v433 = vadd.f32 %v419, %v429
        %v434 = vmax.f32 %v432, 0.0
        %v435 = vmax.f32 %v433, 0.0
        %v436 = vld [vmem:[#allocation2] sm:$0xff]
        %v437 = vld [vmem:[#allocation2 + $0x8] sm:$0xff]
        %v438 = vld [vmem:[#allocation2 + $0x10] sm:$0xff]
        %v439 = vld [vmem:[#allocation2 + $0x18] sm:$0xff]
        %v440 = vld [vmem:[#allocation2 + $0x20] sm:$0xff]
        %v441 = vld [vmem:[#allocation2 + $0x28] sm:$0xff]
        %v442 = vld [vmem:[#allocation2 + $0x30] sm:$0xff]
        %v443 = vld [vmem:[#allocation2 + $0x38] sm:$0xff]
        %v444 = vpack.c.bf16 %v434, %v434
        %v445 = vpack.c.bf16 %v435, %v435
        %v446 = vld [vmem:[%s341] sm:$0xff]
        %v447 = vld [vmem:[%s341 + $0x8] sm:$0xff]
        %v448 = vld [vmem:[%s341 + $0x10] sm:$0xff]
        %v449 = vld [vmem:[%s341 + $0x18] sm:$0xff]
        %v450 = vld [vmem:[%s341 + $0x20] sm:$0xff]
        %v451 = vld [vmem:[%s341 + $0x28] sm:$0xff]
        %v452 = vld [vmem:[%s341 + $0x30] sm:$0xff]
        %v453 = vld [vmem:[%s341 + $0x38] sm:$0xff]
        %v454 = vld [vmem:[%s341 + $0x40] sm:$0xff]
        %v455 = vld [vmem:[%s341 + $0x48] sm:$0xff]
        %v456 = vld [vmem:[%s341 + $0x50] sm:$0xff]
        %v457 = vld [vmem:[%s341 + $0x58] sm:$0xff]
        %v458 = vld [vmem:[%s341 + $0x60] sm:$0xff]
        %v459 = vld [vmem:[%s341 + $0x68] sm:$0xff]
        %v460 = vld [vmem:[%s341 + $0x70] sm:$0xff]
        %v461 = vld [vmem:[%s341 + $0x78] sm:$0xff]
        %v462 = vld [vmem:[%s341 + $0x80] sm:$0xff]
        %v463 = vld [vmem:[%s341 + $0x88] sm:$0xff]
        %v464 = vld [vmem:[%s341 + $0x90] sm:$0xff]
        %v465 = vld [vmem:[%s341 + $0x98] sm:$0xff]
        %v466 = vld [vmem:[%s341 + $0xa0] sm:$0xff]
        %v467 = vld [vmem:[%s341 + $0xa8] sm:$0xff]
        %v468 = vld [vmem:[%s341 + $0xb0] sm:$0xff]
        %v469 = vld [vmem:[%s341 + $0xb8] sm:$0xff]
        %v470 = vld [vmem:[%s341 + $0xc0] sm:$0xff]
        %v471 = vld [vmem:[%s341 + $0xc8] sm:$0xff]
        %v472 = vld [vmem:[%s341 + $0xd0] sm:$0xff]
        %v473 = vld [vmem:[%s341 + $0xd8] sm:$0xff]
        %v474 = vld [vmem:[%s341 + $0xe0] sm:$0xff]
        %v475 = vld [vmem:[%s341 + $0xe8] sm:$0xff]
        %v476 = vld [vmem:[%s341 + $0xf0] sm:$0xff]
        %v477 = vld [vmem:[%s341 + $0xf8] sm:$0xff]
        %v478 = vld [vmem:[%s341 + $0x100] sm:$0xff]
        %v479 = vld [vmem:[%s341 + $0x108] sm:$0xff]
        %v480 = vld [vmem:[%s341 + $0x110] sm:$0xff]
        %v481 = vld [vmem:[%s341 + $0x118] sm:$0xff]
        %v482 = vld [vmem:[%s341 + $0x120] sm:$0xff]
        %v483 = vld [vmem:[%s341 + $0x128] sm:$0xff]
        %v484 = vld [vmem:[%s341 + $0x130] sm:$0xff]
        %v485 = vld [vmem:[%s341 + $0x138] sm:$0xff]
        %v486 = vld [vmem:[%s341 + $0x140] sm:$0xff]
        %v487 = vld [vmem:[%s341 + $0x148] sm:$0xff]
        %v488 = vld [vmem:[%s341 + $0x150] sm:$0xff]
        %v489 = vld [vmem:[%s341 + $0x158] sm:$0xff]
        %v490 = vld [vmem:[%s341 + $0x160] sm:$0xff]
        %v491 = vld [vmem:[%s341 + $0x168] sm:$0xff]
        %v492 = vld [vmem:[%s341 + $0x170] sm:$0xff]
        %v493 = vld [vmem:[%s341 + $0x178] sm:$0xff]
        %v494 = vld [vmem:[%s341 + $0x180] sm:$0xff]
        %v495 = vld [vmem:[%s341 + $0x188] sm:$0xff]
        %v496 = vld [vmem:[%s341 + $0x190] sm:$0xff]
        %v497 = vld [vmem:[%s341 + $0x198] sm:$0xff]
        %v498 = vld [vmem:[%s341 + $0x1a0] sm:$0xff]
        %v499 = vld [vmem:[%s341 + $0x1a8] sm:$0xff]
        %v500 = vld [vmem:[%s341 + $0x1b0] sm:$0xff]
        %v501 = vld [vmem:[%s341 + $0x1b8] sm:$0xff]
        %v502 = vld [vmem:[%s341 + $0x1c0] sm:$0xff]
        %v503 = vld [vmem:[%s341 + $0x1c8] sm:$0xff]
        %v504 = vld [vmem:[%s341 + $0x1d0] sm:$0xff]
        %v505 = vld [vmem:[%s341 + $0x1d8] sm:$0xff]
        %v506 = vld [vmem:[%s341 + $0x1e0] sm:$0xff]
        %v507 = vld [vmem:[%s341 + $0x1e8] sm:$0xff]
        %v508 = vld [vmem:[%s341 + $0x1f0] sm:$0xff]
        %v509 = vld [vmem:[%s341 + $0x1f8] sm:$0xff]
        %v510 = vld [vmem:[%s341 + $0x200] sm:$0xff]
        %v511 = vld [vmem:[%s341 + $0x208] sm:$0xff]
        %v512 = vld [vmem:[%s341 + $0x210] sm:$0xff]
        %v513 = vld [vmem:[%s341 + $0x218] sm:$0xff]
        %v514 = vld [vmem:[%s341 + $0x220] sm:$0xff]
        %v515 = vld [vmem:[%s341 + $0x228] sm:$0xff]
        %v516 = vld [vmem:[%s341 + $0x230] sm:$0xff]
        %v517 = vld [vmem:[%s341 + $0x238] sm:$0xff]
        %v518 = vld [vmem:[%s341 + $0x240] sm:$0xff]
        %v519 = vld [vmem:[%s341 + $0x248] sm:$0xff]
        %v520 = vld [vmem:[%s341 + $0x250] sm:$0xff]
        %v521 = vld [vmem:[%s341 + $0x258] sm:$0xff]
        %v522 = vld [vmem:[%s341 + $0x260] sm:$0xff]
        %v523 = vld [vmem:[%s341 + $0x268] sm:$0xff]
        %v524 = vld [vmem:[%s341 + $0x270] sm:$0xff]
        %v525 = vld [vmem:[%s341 + $0x278] sm:$0xff]
        %v526 = vld [vmem:[%s341 + $0x280] sm:$0xff]
        %v527 = vld [vmem:[%s341 + $0x288] sm:$0xff]
        %v528 = vld [vmem:[%s341 + $0x290] sm:$0xff]
        %v529 = vld [vmem:[%s341 + $0x298] sm:$0xff]
        %v530 = vld [vmem:[%s341 + $0x2a0] sm:$0xff]
        %v531 = vld [vmem:[%s341 + $0x2a8] sm:$0xff]
        %v532 = vld [vmem:[%s341 + $0x2b0] sm:$0xff]
        %v533 = vld [vmem:[%s341 + $0x2b8] sm:$0xff]
        %v534 = vld [vmem:[%s341 + $0x2c0] sm:$0xff]
        %v535 = vld [vmem:[%s341 + $0x2c8] sm:$0xff]
        %v536 = vld [vmem:[%s341 + $0x2d0] sm:$0xff]
        %v537 = vld [vmem:[%s341 + $0x2d8] sm:$0xff]
        %v538 = vld [vmem:[%s341 + $0x2e0] sm:$0xff]
        %v539 = vld [vmem:[%s341 + $0x2e8] sm:$0xff]
        %v540 = vld [vmem:[%s341 + $0x2f0] sm:$0xff]
        %v541 = vld [vmem:[%s341 + $0x2f8] sm:$0xff]
        %v542 = vld [vmem:[%s341 + $0x300] sm:$0xff]
        %v543 = vld [vmem:[%s341 + $0x308] sm:$0xff]
        %v544 = vld [vmem:[%s341 + $0x310] sm:$0xff]
        %v545 = vld [vmem:[%s341 + $0x318] sm:$0xff]
        %v546 = vld [vmem:[%s341 + $0x320] sm:$0xff]
        %v547 = vld [vmem:[%s341 + $0x328] sm:$0xff]
        %v548 = vld [vmem:[%s341 + $0x330] sm:$0xff]
        %v549 = vld [vmem:[%s341 + $0x338] sm:$0xff]
        %v550 = vld [vmem:[%s341 + $0x340] sm:$0xff]
        %v551 = vld [vmem:[%s341 + $0x348] sm:$0xff]
        %v552 = vld [vmem:[%s341 + $0x350] sm:$0xff]
        %v553 = vld [vmem:[%s341 + $0x358] sm:$0xff]
        %v554 = vld [vmem:[%s341 + $0x360] sm:$0xff]
        %v555 = vld [vmem:[%s341 + $0x368] sm:$0xff]
        %v556 = vld [vmem:[%s341 + $0x370] sm:$0xff]
        %v557 = vld [vmem:[%s341 + $0x378] sm:$0xff]
        %v558 = vld [vmem:[%s341 + $0x380] sm:$0xff]
        %v559 = vld [vmem:[%s341 + $0x388] sm:$0xff]
        %v560 = vld [vmem:[%s341 + $0x390] sm:$0xff]
        %v561 = vld [vmem:[%s341 + $0x398] sm:$0xff]
        %v562 = vld [vmem:[%s341 + $0x3a0] sm:$0xff]
        %v563 = vld [vmem:[%s341 + $0x3a8] sm:$0xff]
        %v564 = vld [vmem:[%s341 + $0x3b0] sm:$0xff]
        %v565 = vld [vmem:[%s341 + $0x3b8] sm:$0xff]
        %v566 = vld [vmem:[%s341 + $0x3c0] sm:$0xff]
        %v567 = vld [vmem:[%s341 + $0x3c8] sm:$0xff]
        %v568 = vld [vmem:[%s341 + $0x3d0] sm:$0xff]
        %v569 = vld [vmem:[%s341 + $0x3d8] sm:$0xff]
        %v570 = vld [vmem:[%s341 + $0x3e0] sm:$0xff]
        %v571 = vld [vmem:[%s341 + $0x3e8] sm:$0xff]
        %v572 = vld [vmem:[%s341 + $0x3f0] sm:$0xff]
        %v573 = vld [vmem:[%s341 + $0x3f8] sm:$0xff]
        %v702 = vunpack.c.l.b16 %v446
        %v703 = vunpack.c.h.b16 %v446
        %v704 = vunpack.c.l.b16 %v447
        %v705 = vunpack.c.h.b16 %v447
        %v706 = vunpack.c.l.b16 %v448
        %v707 = vunpack.c.h.b16 %v448
        %v708 = vunpack.c.l.b16 %v449
        %v709 = vunpack.c.h.b16 %v449
        %v710 = vunpack.c.l.b16 %v450
        %v711 = vunpack.c.h.b16 %v450
        %v712 = vunpack.c.l.b16 %v451
        %v713 = vunpack.c.h.b16 %v451
        %v714 = vunpack.c.l.b16 %v452
        %v715 = vunpack.c.h.b16 %v452
        %v716 = vunpack.c.l.b16 %v453
        %v717 = vunpack.c.h.b16 %v453
        %v718 = vunpack.c.l.b16 %v454
        %v719 = vunpack.c.h.b16 %v454
        %v720 = vunpack.c.l.b16 %v455
        %v721 = vunpack.c.h.b16 %v455
        %v722 = vunpack.c.l.b16 %v456
        %v723 = vunpack.c.h.b16 %v456
        %v724 = vunpack.c.l.b16 %v457
        %v725 = vunpack.c.h.b16 %v457
        %v726 = vunpack.c.l.b16 %v458
        %v727 = vunpack.c.h.b16 %v458
        %v728 = vunpack.c.l.b16 %v459
        %v729 = vunpack.c.h.b16 %v459
        %v730 = vunpack.c.l.b16 %v460
        %v731 = vunpack.c.h.b16 %v460
        %v732 = vunpack.c.l.b16 %v461
        %v733 = vunpack.c.h.b16 %v461
        %v734 = vunpack.c.l.b16 %v462
        %v735 = vunpack.c.h.b16 %v462
        %v736 = vunpack.c.l.b16 %v463
        %v737 = vunpack.c.h.b16 %v463
        %v738 = vunpack.c.l.b16 %v464
        %v739 = vunpack.c.h.b16 %v464
        %v740 = vunpack.c.l.b16 %v465
        %v741 = vunpack.c.h.b16 %v465
        %v742 = vunpack.c.l.b16 %v466
        %v743 = vunpack.c.h.b16 %v466
        %v744 = vunpack.c.l.b16 %v467
        %v745 = vunpack.c.h.b16 %v467
        %v746 = vunpack.c.l.b16 %v468
        %v747 = vunpack.c.h.b16 %v468
        %v748 = vunpack.c.l.b16 %v469
        %v749 = vunpack.c.h.b16 %v469
        %v750 = vunpack.c.l.b16 %v470
        %v751 = vunpack.c.h.b16 %v470
        %v752 = vunpack.c.l.b16 %v471
        %v753 = vunpack.c.h.b16 %v471
        %v754 = vunpack.c.l.b16 %v472
        %v755 = vunpack.c.h.b16 %v472
        %v756 = vunpack.c.l.b16 %v473
        %v757 = vunpack.c.h.b16 %v473
        %v758 = vunpack.c.l.b16 %v474
        %v759 = vunpack.c.h.b16 %v474
        %v760 = vunpack.c.l.b16 %v475
        %v761 = vunpack.c.h.b16 %v475
        %v762 = vunpack.c.l.b16 %v476
        %v763 = vunpack.c.h.b16 %v476
        %v764 = vunpack.c.l.b16 %v477
        %v765 = vunpack.c.h.b16 %v477
        %v766 = vunpack.c.l.b16 %v478
        %v767 = vunpack.c.h.b16 %v478
        %v768 = vunpack.c.l.b16 %v479
        %v769 = vunpack.c.h.b16 %v479
        %v770 = vunpack.c.l.b16 %v480
        %v771 = vunpack.c.h.b16 %v480
        %v772 = vunpack.c.l.b16 %v481
        %v773 = vunpack.c.h.b16 %v481
        %v774 = vunpack.c.l.b16 %v482
        %v775 = vunpack.c.h.b16 %v482
        %v776 = vunpack.c.l.b16 %v483
        %v777 = vunpack.c.h.b16 %v483
        %v778 = vunpack.c.l.b16 %v484
        %v779 = vunpack.c.h.b16 %v484
        %v780 = vunpack.c.l.b16 %v485
        %v781 = vunpack.c.h.b16 %v485
        %v782 = vunpack.c.l.b16 %v486
        %v783 = vunpack.c.h.b16 %v486
        %v784 = vunpack.c.l.b16 %v487
        %v785 = vunpack.c.h.b16 %v487
        %v786 = vunpack.c.l.b16 %v488
        %v787 = vunpack.c.h.b16 %v488
        %v788 = vunpack.c.l.b16 %v489
        %v789 = vunpack.c.h.b16 %v489
        %v790 = vunpack.c.l.b16 %v490
        %v791 = vunpack.c.h.b16 %v490
        %v792 = vunpack.c.l.b16 %v491
        %v793 = vunpack.c.h.b16 %v491
        %v794 = vunpack.c.l.b16 %v492
        %v795 = vunpack.c.h.b16 %v492
        %v796 = vunpack.c.l.b16 %v493
        %v797 = vunpack.c.h.b16 %v493
        %v798 = vunpack.c.l.b16 %v494
        %v799 = vunpack.c.h.b16 %v494
        %v800 = vunpack.c.l.b16 %v495
        %v801 = vunpack.c.h.b16 %v495
        %v802 = vunpack.c.l.b16 %v496
        %v803 = vunpack.c.h.b16 %v496
        %v804 = vunpack.c.l.b16 %v497
        %v805 = vunpack.c.h.b16 %v497
        %v806 = vunpack.c.l.b16 %v498
        %v807 = vunpack.c.h.b16 %v498
        %v808 = vunpack.c.l.b16 %v499
        %v809 = vunpack.c.h.b16 %v499
        %v810 = vunpack.c.l.b16 %v500
        %v811 = vunpack.c.h.b16 %v500
        %v812 = vunpack.c.l.b16 %v501
        %v813 = vunpack.c.h.b16 %v501
        %v814 = vunpack.c.l.b16 %v502
        %v815 = vunpack.c.h.b16 %v502
        %v816 = vunpack.c.l.b16 %v503
        %v817 = vunpack.c.h.b16 %v503
        %v818 = vunpack.c.l.b16 %v504
        %v819 = vunpack.c.h.b16 %v504
        %v820 = vunpack.c.l.b16 %v505
        %v821 = vunpack.c.h.b16 %v505
        %v822 = vunpack.c.l.b16 %v506
        %v823 = vunpack.c.h.b16 %v506
        %v824 = vunpack.c.l.b16 %v507
        %v825 = vunpack.c.h.b16 %v507
        %v826 = vunpack.c.l.b16 %v508
        %v827 = vunpack.c.h.b16 %v508
        %v828 = vunpack.c.l.b16 %v509
        %v829 = vunpack.c.h.b16 %v509
        %v830 = vunpack.c.l.b16 %v510
        %v831 = vunpack.c.h.b16 %v510
        %v832 = vunpack.c.l.b16 %v511
        %v833 = vunpack.c.h.b16 %v511
        %v834 = vunpack.c.l.b16 %v512
        %v835 = vunpack.c.h.b16 %v512
        %v836 = vunpack.c.l.b16 %v513
        %v837 = vunpack.c.h.b16 %v513
        %v838 = vunpack.c.l.b16 %v514
        %v839 = vunpack.c.h.b16 %v514
        %v840 = vunpack.c.l.b16 %v515
        %v841 = vunpack.c.h.b16 %v515
        %v842 = vunpack.c.l.b16 %v516
        %v843 = vunpack.c.h.b16 %v516
        %v844 = vunpack.c.l.b16 %v517
        %v845 = vunpack.c.h.b16 %v517
        %v846 = vunpack.c.l.b16 %v518
        %v847 = vunpack.c.h.b16 %v518
        %v848 = vunpack.c.l.b16 %v519
        %v849 = vunpack.c.h.b16 %v519
        %v850 = vunpack.c.l.b16 %v520
        %v851 = vunpack.c.h.b16 %v520
        %v852 = vunpack.c.l.b16 %v521
        %v853 = vunpack.c.h.b16 %v521
        %v854 = vunpack.c.l.b16 %v522
        %v855 = vunpack.c.h.b16 %v522
        %v856 = vunpack.c.l.b16 %v523
        %v857 = vunpack.c.h.b16 %v523
        %v858 = vunpack.c.l.b16 %v524
        %v859 = vunpack.c.h.b16 %v524
        %v860 = vunpack.c.l.b16 %v525
        %v861 = vunpack.c.h.b16 %v525
        %v862 = vunpack.c.l.b16 %v526
        %v863 = vunpack.c.h.b16 %v526
        %v864 = vunpack.c.l.b16 %v527
        %v865 = vunpack.c.h.b16 %v527
        %v866 = vunpack.c.l.b16 %v528
        %v867 = vunpack.c.h.b16 %v528
        %v868 = vunpack.c.l.b16 %v529
        %v869 = vunpack.c.h.b16 %v529
        %v870 = vunpack.c.l.b16 %v530
        %v871 = vunpack.c.h.b16 %v530
        %v872 = vunpack.c.l.b16 %v531
        %v873 = vunpack.c.h.b16 %v531
        %v874 = vunpack.c.l.b16 %v532
        %v875 = vunpack.c.h.b16 %v532
        %v876 = vunpack.c.l.b16 %v533
        %v877 = vunpack.c.h.b16 %v533
        %v878 = vunpack.c.l.b16 %v534
        %v879 = vunpack.c.h.b16 %v534
        %v880 = vunpack.c.l.b16 %v535
        %v881 = vunpack.c.h.b16 %v535
        %v882 = vunpack.c.l.b16 %v536
        %v883 = vunpack.c.h.b16 %v536
        %v884 = vunpack.c.l.b16 %v537
        %v885 = vunpack.c.h.b16 %v537
        %v886 = vunpack.c.l.b16 %v538
        %v887 = vunpack.c.h.b16 %v538
        %v888 = vunpack.c.l.b16 %v539
        %v889 = vunpack.c.h.b16 %v539
        %v890 = vunpack.c.l.b16 %v540
        %v891 = vunpack.c.h.b16 %v540
        %v892 = vunpack.c.l.b16 %v541
        %v893 = vunpack.c.h.b16 %v541
        %v894 = vunpack.c.l.b16 %v542
        %v895 = vunpack.c.h.b16 %v542
        %v896 = vunpack.c.l.b16 %v543
        %v897 = vunpack.c.h.b16 %v543
        %v898 = vunpack.c.l.b16 %v544
        %v899 = vunpack.c.h.b16 %v544
        %v900 = vunpack.c.l.b16 %v545
        %v901 = vunpack.c.h.b16 %v545
        %v902 = vunpack.c.l.b16 %v546
        %v903 = vunpack.c.h.b16 %v546
        %v904 = vunpack.c.l.b16 %v547
        %v905 = vunpack.c.h.b16 %v547
        %v906 = vunpack.c.l.b16 %v548
        %v907 = vunpack.c.h.b16 %v548
        %v908 = vunpack.c.l.b16 %v549
        %v909 = vunpack.c.h.b16 %v549
        %v910 = vunpack.c.l.b16 %v550
        %v911 = vunpack.c.h.b16 %v550
        %v912 = vunpack.c.l.b16 %v551
        %v913 = vunpack.c.h.b16 %v551
        %v914 = vunpack.c.l.b16 %v552
        %v915 = vunpack.c.h.b16 %v552
        %v916 = vunpack.c.l.b16 %v553
        %v917 = vunpack.c.h.b16 %v553
        %v918 = vunpack.c.l.b16 %v554
        %v919 = vunpack.c.h.b16 %v554
        %v920 = vunpack.c.l.b16 %v555
        %v921 = vunpack.c.h.b16 %v555
        %v922 = vunpack.c.l.b16 %v556
        %v923 = vunpack.c.h.b16 %v556
        %v924 = vunpack.c.l.b16 %v557
        %v925 = vunpack.c.h.b16 %v557
        %v926 = vunpack.c.l.b16 %v558
        %v927 = vunpack.c.h.b16 %v558
        %v928 = vunpack.c.l.b16 %v559
        %v929 = vunpack.c.h.b16 %v559
        %v930 = vunpack.c.l.b16 %v560
        %v931 = vunpack.c.h.b16 %v560
        %v932 = vunpack.c.l.b16 %v561
        %v933 = vunpack.c.h.b16 %v561
        %v934 = vunpack.c.l.b16 %v562
        %v935 = vunpack.c.h.b16 %v562
        %v936 = vunpack.c.l.b16 %v563
        %v937 = vunpack.c.h.b16 %v563
        %v938 = vunpack.c.l.b16 %v564
        %v939 = vunpack.c.h.b16 %v564
        %v940 = vunpack.c.l.b16 %v565
        %v941 = vunpack.c.h.b16 %v565
        %v942 = vunpack.c.l.b16 %v566
        %v943 = vunpack.c.h.b16 %v566
        %v944 = vunpack.c.l.b16 %v567
        %v945 = vunpack.c.h.b16 %v567
        %v946 = vunpack.c.l.b16 %v568
        %v947 = vunpack.c.h.b16 %v568
        %v948 = vunpack.c.l.b16 %v569
        %v949 = vunpack.c.h.b16 %v569
        %v950 = vunpack.c.l.b16 %v570
        %v951 = vunpack.c.h.b16 %v570
        %v952 = vunpack.c.l.b16 %v571
        %v953 = vunpack.c.h.b16 %v571
        %v954 = vunpack.c.l.b16 %v572
        %v955 = vunpack.c.h.b16 %v572
        %v956 = vunpack.c.l.b16 %v573
        %v957 = vunpack.c.h.b16 %v573
        %v958 = vpack.c.b16 %v710, %v702
        %v959 = vpack.c.b16 %v711, %v703
        %v960 = vpack.c.b16 %v712, %v704
        %v961 = vpack.c.b16 %v713, %v705
        %v962 = vpack.c.b16 %v714, %v706
        %v963 = vpack.c.b16 %v715, %v707
        %v964 = vpack.c.b16 %v716, %v708
        %v965 = vpack.c.b16 %v717, %v709
        %v966 = vpack.c.b16 %v726, %v718
        %v967 = vpack.c.b16 %v727, %v719
        %v968 = vpack.c.b16 %v728, %v720
        %v969 = vpack.c.b16 %v729, %v721
        %v970 = vpack.c.b16 %v730, %v722
        %v971 = vpack.c.b16 %v731, %v723
        %v972 = vpack.c.b16 %v732, %v724
        %v973 = vpack.c.b16 %v733, %v725
        %v974 = vpack.c.b16 %v742, %v734
        %v975 = vpack.c.b16 %v743, %v735
        %v976 = vpack.c.b16 %v744, %v736
        %v977 = vpack.c.b16 %v745, %v737
        %v978 = vpack.c.b16 %v746, %v738
        %v979 = vpack.c.b16 %v747, %v739
        %v980 = vpack.c.b16 %v748, %v740
        %v981 = vpack.c.b16 %v749, %v741
        %v982 = vpack.c.b16 %v758, %v750
        %v983 = vpack.c.b16 %v759, %v751
        %v984 = vpack.c.b16 %v760, %v752
        %v985 = vpack.c.b16 %v761, %v753
        %v986 = vpack.c.b16 %v762, %v754
        %v987 = vpack.c.b16 %v763, %v755
        %v988 = vpack.c.b16 %v764, %v756
        %v989 = vpack.c.b16 %v765, %v757
        %v990 = vpack.c.b16 %v774, %v766
        %v991 = vpack.c.b16 %v775, %v767
        %v992 = vpack.c.b16 %v776, %v768
        %v993 = vpack.c.b16 %v777, %v769
        %v994 = vpack.c.b16 %v778, %v770
        %v995 = vpack.c.b16 %v779, %v771
        %v996 = vpack.c.b16 %v780, %v772
        %v997 = vpack.c.b16 %v781, %v773
        %v998 = vpack.c.b16 %v790, %v782
        %v999 = vpack.c.b16 %v791, %v783
        %v1000 = vpack.c.b16 %v792, %v784
        %v1001 = vpack.c.b16 %v793, %v785
        %v1002 = vpack.c.b16 %v794, %v786
        %v1003 = vpack.c.b16 %v795, %v787
        %v1004 = vpack.c.b16 %v796, %v788
        %v1005 = vpack.c.b16 %v797, %v789
        %v1006 = vpack.c.b16 %v806, %v798
        %v1007 = vpack.c.b16 %v807, %v799
        %v1008 = vpack.c.b16 %v808, %v800
        %v1009 = vpack.c.b16 %v809, %v801
        %v1010 = vpack.c.b16 %v810, %v802
        %v1011 = vpack.c.b16 %v811, %v803
        %v1012 = vpack.c.b16 %v812, %v804
        %v1013 = vpack.c.b16 %v813, %v805
        %v1014 = vpack.c.b16 %v822, %v814
        %v1015 = vpack.c.b16 %v823, %v815
        %v1016 = vpack.c.b16 %v824, %v816
        %v1017 = vpack.c.b16 %v825, %v817
        %v1018 = vpack.c.b16 %v826, %v818
        %v1019 = vpack.c.b16 %v827, %v819
        %v1020 = vpack.c.b16 %v828, %v820
        %v1021 = vpack.c.b16 %v829, %v821
        %v1022 = vpack.c.b16 %v838, %v830
        %v1023 = vpack.c.b16 %v839, %v831
        %v1024 = vpack.c.b16 %v840, %v832
        %v1025 = vpack.c.b16 %v841, %v833
        %v1026 = vpack.c.b16 %v842, %v834
        %v1027 = vpack.c.b16 %v843, %v835
        %v1028 = vpack.c.b16 %v844, %v836
        %v1029 = vpack.c.b16 %v845, %v837
        %v1030 = vpack.c.b16 %v854, %v846
        %v1031 = vpack.c.b16 %v855, %v847
        %v1032 = vpack.c.b16 %v856, %v848
        %v1033 = vpack.c.b16 %v857, %v849
        %v1034 = vpack.c.b16 %v858, %v850
        %v1035 = vpack.c.b16 %v859, %v851
        %v1036 = vpack.c.b16 %v860, %v852
        %v1037 = vpack.c.b16 %v861, %v853
        %v1038 = vpack.c.b16 %v870, %v862
        %v1039 = vpack.c.b16 %v871, %v863
        %v1040 = vpack.c.b16 %v872, %v864
        %v1041 = vpack.c.b16 %v873, %v865
        %v1042 = vpack.c.b16 %v874, %v866
        %v1043 = vpack.c.b16 %v875, %v867
        %v1044 = vpack.c.b16 %v876, %v868
        %v1045 = vpack.c.b16 %v877, %v869
        %v1046 = vpack.c.b16 %v886, %v878
        %v1047 = vpack.c.b16 %v887, %v879
        %v1048 = vpack.c.b16 %v888, %v880
        %v1049 = vpack.c.b16 %v889, %v881
        %v1050 = vpack.c.b16 %v890, %v882
        %v1051 = vpack.c.b16 %v891, %v883
        %v1052 = vpack.c.b16 %v892, %v884
        %v1053 = vpack.c.b16 %v893, %v885
        %v1054 = vpack.c.b16 %v902, %v894
        %v1055 = vpack.c.b16 %v903, %v895
        %v1056 = vpack.c.b16 %v904, %v896
        %v1057 = vpack.c.b16 %v905, %v897
        %v1058 = vpack.c.b16 %v906, %v898
        %v1059 = vpack.c.b16 %v907, %v899
        %v1060 = vpack.c.b16 %v908, %v900
        %v1061 = vpack.c.b16 %v909, %v901
        %v1062 = vpack.c.b16 %v918, %v910
        %v1063 = vpack.c.b16 %v919, %v911
        %v1064 = vpack.c.b16 %v920, %v912
        %v1065 = vpack.c.b16 %v921, %v913
        %v1066 = vpack.c.b16 %v922, %v914
        %v1067 = vpack.c.b16 %v923, %v915
        %v1068 = vpack.c.b16 %v924, %v916
        %v1069 = vpack.c.b16 %v925, %v917
        %v1070 = vpack.c.b16 %v934, %v926
        %v1071 = vpack.c.b16 %v935, %v927
        %v1072 = vpack.c.b16 %v936, %v928
        %v1073 = vpack.c.b16 %v937, %v929
        %v1074 = vpack.c.b16 %v938, %v930
        %v1075 = vpack.c.b16 %v939, %v931
        %v1076 = vpack.c.b16 %v940, %v932
        %v1077 = vpack.c.b16 %v941, %v933
        %v1078 = vpack.c.b16 %v950, %v942
        %v1079 = vpack.c.b16 %v951, %v943
        %v1080 = vpack.c.b16 %v952, %v944
        %v1081 = vpack.c.b16 %v953, %v945
        %v1082 = vpack.c.b16 %v954, %v946
        %v1083 = vpack.c.b16 %v955, %v947
        %v1084 = vpack.c.b16 %v956, %v948
        %v1085 = vpack.c.b16 %v957, %v949
        %1214 = vmatprep.subr.bf16.mxu0 %v959
        %1215 = vmatpush1.bf16.msra.mxu0 %v958
        %1216 = vmatprep.subr.bf16.mxu0 %v967
        %1217 = vmatpush1.bf16.msra.mxu0 %v966
        %1218 = vmatprep.subr.bf16.mxu0 %v975
        %1219 = vmatpush1.bf16.msra.mxu0 %v974
        %1220 = vmatprep.subr.bf16.mxu0 %v983
        %1221 = vmatpush1.bf16.msra.mxu0 %v982
        %1222 = vmatprep.subr.bf16.mxu0 %v991
        %1223 = vmatpush1.bf16.msra.mxu0 %v990
        %1224 = vmatprep.subr.bf16.mxu0 %v999
        %1225 = vmatpush1.bf16.msra.mxu0 %v998
        %1226 = vmatprep.subr.bf16.mxu0 %v1007
        %1227 = vmatpush1.bf16.msra.mxu0 %v1006
        %1228 = vmatprep.subr.bf16.mxu0 %v1015
        %1229 = vmatpush1.bf16.msra.mxu0 %v1014
        %1230 = vmatprep.subr.bf16.mxu0 %v1023
        %1231 = vmatpush1.bf16.msra.mxu0 %v1022
        %1232 = vmatprep.subr.bf16.mxu0 %v1031
        %1233 = vmatpush1.bf16.msra.mxu0 %v1030
        %1234 = vmatprep.subr.bf16.mxu0 %v1039
        %1235 = vmatpush1.bf16.msra.mxu0 %v1038
        %1236 = vmatprep.subr.bf16.mxu0 %v1047
        %1237 = vmatpush1.bf16.msra.mxu0 %v1046
        %1238 = vmatprep.subr.bf16.mxu0 %v1055
        %1239 = vmatpush1.bf16.msra.mxu0 %v1054
        %1240 = vmatprep.subr.bf16.mxu0 %v1063
        %1241 = vmatpush1.bf16.msra.mxu0 %v1062
        %1242 = vmatprep.subr.bf16.mxu0 %v1071
        %1243 = vmatpush1.bf16.msra.mxu0 %v1070
        %1244 = vmatprep.subr.bf16.mxu0 %v1079
        %1245 = vmatpush1.bf16.msra.mxu0 %v1078
        %1246 = vmatprep.mubr.bf16.mxu0 %v445
        %1247 = vmatmul.mubr.bf16.gmra.mrb[0].mxu0 %v444
        %v1248 = vpop.f32.mrb[0].mxu0
        %v1249 = vadd.f32 0.0, %v1248
        %v1250 = vpop.f32.mrb[0].mxu0
        %v1251 = vadd.f32 0.0, %v1250
        %v1252 = vpop.f32.mrb[0].mxu0
        %v1253 = vpop.f32.mrb[0].mxu0
        %1254 = vdwg.mxu0
        %1255 = vmatprep.subr.bf16.mxu0 %v961
        %1256 = vmatpush1.bf16.msra.mxu0 %v960
        %1257 = vmatprep.subr.bf16.mxu0 %v969
        %1258 = vmatpush1.bf16.msra.mxu0 %v968
        %1259 = vmatprep.subr.bf16.mxu0 %v977
        %1260 = vmatpush1.bf16.msra.mxu0 %v976
        %1261 = vmatprep.subr.bf16.mxu0 %v985
        %1262 = vmatpush1.bf16.msra.mxu0 %v984
        %1263 = vmatprep.subr.bf16.mxu0 %v993
        %1264 = vmatpush1.bf16.msra.mxu0 %v992
        %1265 = vmatprep.subr.bf16.mxu0 %v1001
        %1266 = vmatpush1.bf16.msra.mxu0 %v1000
        %1267 = vmatprep.subr.bf16.mxu0 %v1009
        %1268 = vmatpush1.bf16.msra.mxu0 %v1008
        %1269 = vmatprep.subr.bf16.mxu0 %v1017
        %1270 = vmatpush1.bf16.msra.mxu0 %v1016
        %1271 = vmatprep.subr.bf16.mxu0 %v1025
        %1272 = vmatpush1.bf16.msra.mxu0 %v1024
        %1273 = vmatprep.subr.bf16.mxu0 %v1033
        %1274 = vmatpush1.bf16.msra.mxu0 %v1032
        %1275 = vmatprep.subr.bf16.mxu0 %v1041
        %1276 = vmatpush1.bf16.msra.mxu0 %v1040
        %1277 = vmatprep.subr.bf16.mxu0 %v1049
        %1278 = vmatpush1.bf16.msra.mxu0 %v1048
        %1279 = vmatprep.subr.bf16.mxu0 %v1057
        %1280 = vmatpush1.bf16.msra.mxu0 %v1056
        %1281 = vmatprep.subr.bf16.mxu0 %v1065
        %1282 = vmatpush1.bf16.msra.mxu0 %v1064
        %1283 = vmatprep.subr.bf16.mxu0 %v1073
        %1284 = vmatpush1.bf16.msra.mxu0 %v1072
        %1285 = vmatprep.subr.bf16.mxu0 %v1081
        %1286 = vmatpush1.bf16.msra.mxu0 %v1080
        %1287 = vmatprep.mubr.bf16.mxu0 %v445
        %1288 = vmatmul.mubr.bf16.gmra.mrb[0].mxu0 %v444
        %v1289 = vpop.f32.mrb[0].mxu0
        %v1290 = vadd.f32 0.0, %v1289
        %v1291 = vpop.f32.mrb[0].mxu0
        %v1292 = vadd.f32 0.0, %v1291
        %v1293 = vpop.f32.mrb[0].mxu0
        %v1294 = vpop.f32.mrb[0].mxu0
        %1295 = vdwg.mxu0
        %1296 = vmatprep.subr.bf16.mxu0 %v963
        %1297 = vmatpush1.bf16.msra.mxu0 %v962
        %1298 = vmatprep.subr.bf16.mxu0 %v971
        %1299 = vmatpush1.bf16.msra.mxu0 %v970
        %1300 = vmatprep.subr.bf16.mxu0 %v979
        %1301 = vmatpush1.bf16.msra.mxu0 %v978
        %1302 = vmatprep.subr.bf16.mxu0 %v987
        %1303 = vmatpush1.bf16.msra.mxu0 %v986
        %1304 = vmatprep.subr.bf16.mxu0 %v995
        %1305 = vmatpush1.bf16.msra.mxu0 %v994
        %1306 = vmatprep.subr.bf16.mxu0 %v1003
        %1307 = vmatpush1.bf16.msra.mxu0 %v1002
        %1308 = vmatprep.subr.bf16.mxu0 %v1011
        %1309 = vmatpush1.bf16.msra.mxu0 %v1010
        %1310 = vmatprep.subr.bf16.mxu0 %v1019
        %1311 = vmatpush1.bf16.msra.mxu0 %v1018
        %1312 = vmatprep.subr.bf16.mxu0 %v1027
        %1313 = vmatpush1.bf16.msra.mxu0 %v1026
        %1314 = vmatprep.subr.bf16.mxu0 %v1035
        %1315 = vmatpush1.bf16.msra.mxu0 %v1034
        %1316 = vmatprep.subr.bf16.mxu0 %v1043
        %1317 = vmatpush1.bf16.msra.mxu0 %v1042
        %1318 = vmatprep.subr.bf16.mxu0 %v1051
        %1319 = vmatpush1.bf16.msra.mxu0 %v1050
        %1320 = vmatprep.subr.bf16.mxu0 %v1059
        %1321 = vmatpush1.bf16.msra.mxu0 %v1058
        %1322 = vmatprep.subr.bf16.mxu0 %v1067
        %1323 = vmatpush1.bf16.msra.mxu0 %v1066
        %1324 = vmatprep.subr.bf16.mxu0 %v1075
        %1325 = vmatpush1.bf16.msra.mxu0 %v1074
        %1326 = vmatprep.subr.bf16.mxu0 %v1083
        %1327 = vmatpush1.bf16.msra.mxu0 %v1082
        %1328 = vmatprep.mubr.bf16.mxu0 %v445
        %1329 = vmatmul.mubr.bf16.gmra.mrb[0].mxu0 %v444
        %v1330 = vpop.f32.mrb[0].mxu0
        %v1331 = vadd.f32 0.0, %v1330
        %v1332 = vpop.f32.mrb[0].mxu0
        %v1333 = vadd.f32 0.0, %v1332
        %v1334 = vpop.f32.mrb[0].mxu0
        %v1335 = vpop.f32.mrb[0].mxu0
        %1336 = vdwg.mxu0
        %1337 = vmatprep.subr.bf16.mxu0 %v965
        %1338 = vmatpush1.bf16.msra.mxu0 %v964
        %1339 = vmatprep.subr.bf16.mxu0 %v973
        %1340 = vmatpush1.bf16.msra.mxu0 %v972
        %1341 = vmatprep.subr.bf16.mxu0 %v981
        %1342 = vmatpush1.bf16.msra.mxu0 %v980
        %1343 = vmatprep.subr.bf16.mxu0 %v989
        %1344 = vmatpush1.bf16.msra.mxu0 %v988
        %1345 = vmatprep.subr.bf16.mxu0 %v997
        %1346 = vmatpush1.bf16.msra.mxu0 %v996
        %1347 = vmatprep.subr.bf16.mxu0 %v1005
        %1348 = vmatpush1.bf16.msra.mxu0 %v1004
        %1349 = vmatprep.subr.bf16.mxu0 %v1013
        %1350 = vmatpush1.bf16.msra.mxu0 %v1012
        %1351 = vmatprep.subr.bf16.mxu0 %v1021
        %1352 = vmatpush1.bf16.msra.mxu0 %v1020
        %1353 = vmatprep.subr.bf16.mxu0 %v1029
        %1354 = vmatpush1.bf16.msra.mxu0 %v1028
        %1355 = vmatprep.subr.bf16.mxu0 %v1037
        %1356 = vmatpush1.bf16.msra.mxu0 %v1036
        %1357 = vmatprep.subr.bf16.mxu0 %v1045
        %1358 = vmatpush1.bf16.msra.mxu0 %v1044
        %1359 = vmatprep.subr.bf16.mxu0 %v1053
        %1360 = vmatpush1.bf16.msra.mxu0 %v1052
        %1361 = vmatprep.subr.bf16.mxu0 %v1061
        %1362 = vmatpush1.bf16.msra.mxu0 %v1060
        %1363 = vmatprep.subr.bf16.mxu0 %v1069
        %1364 = vmatpush1.bf16.msra.mxu0 %v1068
        %1365 = vmatprep.subr.bf16.mxu0 %v1077
        %1366 = vmatpush1.bf16.msra.mxu0 %v1076
        %1367 = vmatprep.subr.bf16.mxu0 %v1085
        %1368 = vmatpush1.bf16.msra.mxu0 %v1084
        %1369 = vmatprep.mubr.bf16.mxu0 %v445
        %1370 = vmatmul.mubr.bf16.gmra.mrb[0].mxu0 %v444
        %v1371 = vpop.f32.mrb[0].mxu0
        %v1372 = vadd.f32 0.0, %v1371
        %v1373 = vpop.f32.mrb[0].mxu0
        %v1374 = vadd.f32 0.0, %v1373
        %v1375 = vpop.f32.mrb[0].mxu0
        %v1376 = vpop.f32.mrb[0].mxu0
        %1377 = vdwg.mxu0
        %v1378 = vadd.f32 %v436, %v1249
        %v1379 = vadd.f32 %v437, %v1251
        %v1380 = vadd.f32 %v438, %v1290
        %v1381 = vadd.f32 %v439, %v1292
        %v1382 = vadd.f32 %v440, %v1331
        %v1383 = vadd.f32 %v441, %v1333
        %v1384 = vadd.f32 %v442, %v1372
        %v1385 = vadd.f32 %v443, %v1374
        %1386 = vst [vmem:[#allocation2] sm:$0xff] %v1378
        %1387 = vst [vmem:[#allocation2 + $0x8] sm:$0xff] %v1379
        %1388 = vst [vmem:[#allocation2 + $0x10] sm:$0xff] %v1380
        %1389 = vst [vmem:[#allocation2 + $0x18] sm:$0xff] %v1381
        %1390 = vst [vmem:[#allocation2 + $0x20] sm:$0xff] %v1382
        %1391 = vst [vmem:[#allocation2 + $0x28] sm:$0xff] %v1383
        %1392 = vst [vmem:[#allocation2 + $0x30] sm:$0xff] %v1384
        %1393 = vst [vmem:[#allocation2 + $0x38] sm:$0xff] %v1385
        %p1394 = scmp.eq.s32.totalorder %s27, 3
        // Predicated region
        $region73: #{tpu_custom_call.1} parent=47 // pred_check
          %p1395 = pneg %p1394
        $region74: #{tpu_custom_call.1} parent=47 // pred_check_branch
          %1397 = sbr.rel (%p1395) target = $region76
        $region75: #{tpu_custom_call.1} parent=47 // pred_region
          %v1398 = vld [vmem:[#allocation2] sm:$0xff]
          %v1399 = vld [vmem:[#allocation2 + $0x8] sm:$0xff]
          %v1400 = vld [vmem:[#allocation2 + $0x10] sm:$0xff]
          %v1401 = vld [vmem:[#allocation2 + $0x18] sm:$0xff]
          %v1402 = vld [vmem:[#allocation2 + $0x20] sm:$0xff]
          %v1403 = vld [vmem:[#allocation2 + $0x28] sm:$0xff]
          %v1404 = vld [vmem:[#allocation2 + $0x30] sm:$0xff]
          %v1405 = vld [vmem:[#allocation2 + $0x38] sm:$0xff]
          %v1406 = vld [vmem:[#allocation9] sm:$0xff]
          %v1408 = vlaneseq
          %v1409 = vshrl.u32 %v1408, 7
          %v1410 = vsub.s32 0, %v1409
          %v1411 = vrot.slane %v1406, %v1410
          %v1412 = vlaneseq
          %v1413 = vshrl.u32 %v1412, 7
          %v1414 = vsub.s32 1, %v1413
          %v1415 = vrot.slane %v1406, %v1414
          %v1416 = vlaneseq
          %v1417 = vshrl.u32 %v1416, 7
          %v1418 = vsub.s32 2, %v1417
          %v1419 = vrot.slane %v1406, %v1418
          %v1420 = vlaneseq
          %v1421 = vshrl.u32 %v1420, 7
          %v1422 = vsub.s32 3, %v1421
          %v1423 = vrot.slane %v1406, %v1422
          %v1424 = vlaneseq
          %v1425 = vshrl.u32 %v1424, 7
          %v1426 = vsub.s32 4, %v1425
          %v1427 = vrot.slane %v1406, %v1426
          %v1428 = vlaneseq
          %v1429 = vshrl.u32 %v1428, 7
          %v1430 = vsub.s32 5, %v1429
          %v1431 = vrot.slane %v1406, %v1430
          %v1432 = vlaneseq
          %v1433 = vshrl.u32 %v1432, 7
          %v1434 = vsub.s32 6, %v1433
          %v1435 = vrot.slane %v1406, %v1434
          %v1436 = vlaneseq
          %v1437 = vshrl.u32 %v1436, 7
          %v1438 = vsub.s32 7, %v1437
          %v1439 = vrot.slane %v1406, %v1438
          %v1448 = vadd.f32 %v1398, %v1411
          %v1449 = vadd.f32 %v1399, %v1415
          %v1450 = vadd.f32 %v1400, %v1419
          %v1451 = vadd.f32 %v1401, %v1423
          %v1452 = vadd.f32 %v1402, %v1427
          %v1453 = vadd.f32 %v1403, %v1431
          %v1454 = vadd.f32 %v1404, %v1435
          %v1455 = vadd.f32 %v1405, %v1439
          %v1456 = vmax.f32 %v1448, 0.0
          %v1457 = vmax.f32 %v1449, 0.0
          %v1458 = vmax.f32 %v1450, 0.0
          %v1459 = vmax.f32 %v1451, 0.0
          %v1460 = vmax.f32 %v1452, 0.0
          %v1461 = vmax.f32 %v1453, 0.0
          %v1462 = vmax.f32 %v1454, 0.0
          %v1463 = vmax.f32 %v1455, 0.0
          %v1464 = vld [vmem:[#allocation11] sm:$0xff]
          %v1466 = vlaneseq
          %v1467 = vshrl.u32 %v1466, 7
          %v1468 = vsub.s32 0, %v1467
          %v1469 = vrot.slane %v1464, %v1468
          %v1470 = vlaneseq
          %v1471 = vshrl.u32 %v1470, 7
          %v1472 = vsub.s32 1, %v1471
          %v1473 = vrot.slane %v1464, %v1472
          %v1474 = vlaneseq
          %v1475 = vshrl.u32 %v1474, 7
          %v1476 = vsub.s32 2, %v1475
          %v1477 = vrot.slane %v1464, %v1476
          %v1478 = vlaneseq
          %v1479 = vshrl.u32 %v1478, 7
          %v1480 = vsub.s32 3, %v1479
          %v1481 = vrot.slane %v1464, %v1480
          %v1482 = vlaneseq
          %v1483 = vshrl.u32 %v1482, 7
          %v1484 = vsub.s32 4, %v1483
          %v1485 = vrot.slane %v1464, %v1484
          %v1486 = vlaneseq
          %v1487 = vshrl.u32 %v1486, 7
          %v1488 = vsub.s32 5, %v1487
          %v1489 = vrot.slane %v1464, %v1488
          %v1490 = vlaneseq
          %v1491 = vshrl.u32 %v1490, 7
          %v1492 = vsub.s32 6, %v1491
          %v1493 = vrot.slane %v1464, %v1492
          %v1494 = vlaneseq
          %v1495 = vshrl.u32 %v1494, 7
          %v1496 = vsub.s32 7, %v1495
          %v1497 = vrot.slane %v1464, %v1496
          %v1506 = vmul.f32 %v1456, %v1469
          %v1507 = vmul.f32 %v1457, %v1473
          %v1508 = vmul.f32 %v1458, %v1477
          %v1509 = vmul.f32 %v1459, %v1481
          %v1510 = vmul.f32 %v1460, %v1485
          %v1511 = vmul.f32 %v1461, %v1489
          %v1512 = vmul.f32 %v1462, %v1493
          %v1513 = vmul.f32 %v1463, %v1497
          %v1514 = vadd.f32 %v1506, %v1507
          %v1515 = vadd.f32 %v1514, %v1508
          %v1516 = vadd.f32 %v1515, %v1509
          %v1517 = vadd.f32 %v1516, %v1510
          %v1518 = vadd.f32 %v1517, %v1511
          %v1519 = vadd.f32 %v1518, %v1512
          %v1520 = vadd.f32 %v1519, %v1513
          %1521 = vadd.xlane.f32.xlu0 %v1520
          %v1522 = vpop.xlane.xlu0 %1521
          %v1523 = vld [vmem:[#allocation3] sm:$0x1]
          %v1525 = vlaneseq
          %v1526 = vshrl.u32 %v1525, 7
          %v1527 = vsub.s32 0, %v1526
          %v1528 = vrot.slane %v1523, %v1527
          %v1530 = vadd.f32 %v1522, %v1528
          %vm1531 = vcmask 7168
          %1532 = vst.msk [vmem:[%s7] sm:$0xff] %vm1531, %v1530
        $region76: #{tpu_custom_call.1} parent=47 // pred_fallthru
          _
        // Predicated region
        $region77: #{tpu_custom_call.1} parent=47 // pred_check
          %p1533 = pneg %p202
        $region78: #{tpu_custom_call.1} parent=47 // pred_check_branch
          %1535 = sbr.rel (%p1533) target = $region80
        $region79: #{tpu_custom_call.1} parent=47 // pred_region
          _
        $region80: #{tpu_custom_call.1} parent=47 // pred_fallthru
          _
        // Predicated region
        $region81: #{tpu_custom_call.1} parent=47 // pred_check
          %p1536 = pneg %p202
        $region82: #{tpu_custom_call.1} parent=47 // pred_check_branch
          %1538 = sbr.rel (%p1536) target = $region84
        $region83: #{tpu_custom_call.1} parent=47 // pred_region
          _
        $region84: #{tpu_custom_call.1} parent=47 // pred_fallthru
          _
      $region48: #{tpu_custom_call.1} parent=5 // pred_fallthru
        _
      %p1539 = scmp.le.s32.totalorder 2, %s22
      // Predicated region
      $region85: #{tpu_custom_call.1} parent=5 // pred_check
        %p1540 = pneg %p1539
      $region86: #{tpu_custom_call.1} parent=5 // pred_check_branch
        %1542 = sbr.rel (%p1540) target = $region88
      $region87: #{tpu_custom_call.1} parent=5 // pred_region
        %s1543 = ssub.s32 %s22, 2
      $region88: #{tpu_custom_call.1} parent=5 // pred_fallthru
        _
    $region6: #{tpu_custom_call.1} parent=1 // loop_footer
      %s26 = sadd.s32 1, %s22
    $region7: #{tpu_custom_call.1} parent=1 // loop_footer_branch
      %21 = sbr.rel target = $region3
    $region8: #{tpu_custom_call.1} parent=1 // loop_exit
      _
    %1544 = vsyncpa [#allocation5], 1
    %s1545 = scalar_lea.sflag [#allocation5], 1
    %1546 = vsyncpa %s1545, 1
    %1547 = vsyncpa [#allocation7], 1
    %s1548 = scalar_lea.sflag [#allocation7], 1
    %1549 = vsyncpa %s1548, 1
    %1550 = vsyncpa [#allocation10], 1

</llo_original>
